<compile_context>
chip_gen: v5e
topology: v5e:2x2
jax: 0.10.0
libtpu: 0.0.40
codegen_flags: <defaults>
</compile_context>

<pallas_src>
import functools

import jax
import jax.numpy as jnp
from jax.experimental import pallas as pl
from jax.experimental.pallas import tpu as pltpu


def _round_up(x: int, m: int) -> int:
    return (x + m - 1) // m * m


# ---------------------------------------------------------------------------
# Pallas kernel: fused (pooled patch-embed + bias) -> (classifier head + bias)
# ---------------------------------------------------------------------------
def _medical_head_kernel(x_ref, w_patch_ref, b_patch_ref, w_cls_ref, b_cls_ref,
                         logits_ref, emb_ref):
    # x_ref       : [TB, Din] bf16  patch-mean-pooled pixels for this batch tile
    # w_patch_ref : [Din, Hp] bf16  (VMEM resident across the grid)
    # b_patch_ref : [1, Hp]   f32
    # w_cls_ref   : [Hp, Cp]  bf16  (VMEM resident across the grid)
    # b_cls_ref   : [1, Cp]   f32
    # logits_ref  : [TB, Cp]  f32 output
    # emb_ref     : [TB, Hp]  f32 output
    feat = jnp.dot(x_ref[...], w_patch_ref[...],
                   preferred_element_type=jnp.float32)
    feat = feat + b_patch_ref[...]                                   # [TB, Hp] f32

    logits = jnp.dot(feat.astype(jnp.bfloat16), w_cls_ref[...],
                     preferred_element_type=jnp.float32)
    logits = logits + b_cls_ref[...]                                 # [TB, Cp] f32

    emb_ref[...] = feat.astype(emb_ref.dtype)
    logits_ref[...] = logits.astype(logits_ref.dtype)


# ---------------------------------------------------------------------------
# Python wrapper (fold pooling into XLA, lane-dense padding, pallas_call, un-pad)
# ---------------------------------------------------------------------------
def specialized_medical_adapter_forward(images, params, *, patch_size):
    """images: [B, C, H, W] float32 (NCHW). Returns dict(logits, embeddings)."""
    B, C, H, W = images.shape
    P = patch_size
    nH, nW = H // P, W // P
    N = nH * nW
    Din = C * P * P

    # mean_N(patchify(x)) @ W == (spatial mean over the patch grid) @ W by
    # linearity.  XLA reads the images once and writes only [B, Din]; the
    # [B, N, Din] patch slab never exists.
    pooled = images.astype(jnp.float32).reshape(B, C, nH, P, nW, P)
    pooled = pooled.mean(axis=(2, 4)).reshape(B, Din)                # [B, Din] f32

    w_patch, b_patch = params['w_patch'], params['b_patch']
    w_cls, b_cls = params['w_cls'], params['b_cls']
    hidden = w_patch.shape[1]
    num_classes = w_cls.shape[1]

    # Tiling: batch rows on a single "parallel" grid axis; Din is NOT padded
    # (block dim == full array dim); hidden / classes padded lane-dense (x128).
    TB = min(128, _round_up(B, 8))
    Bp = _round_up(B, TB)
    # v7x has two TensorCores: keep >= 2 parallel batch steps when batch allows.
    if Bp // TB < 2 and TB > 8:
        TB = max(8, _round_up(TB // 2, 8))
        Bp = _round_up(B, TB)
    Hp = _round_up(hidden, 128)
    Cp = _round_up(num_classes, 128)

    x_p = jnp.pad(pooled, ((0, Bp - B), (0, 0))).astype(jnp.bfloat16)
    w_patch_p = jnp.pad(w_patch, ((0, 0), (0, Hp - hidden))).astype(jnp.bfloat16)
    b_patch_p = jnp.pad(b_patch, ((0, 0), (0, Hp - hidden))).astype(jnp.float32)
    w_cls_p = jnp.pad(w_cls, ((0, Hp - hidden), (0, Cp - num_classes))
                      ).astype(jnp.bfloat16)
    b_cls_p = jnp.pad(b_cls, ((0, 0), (0, Cp - num_classes))).astype(jnp.float32)

    # Explicit VMEM budget: double-buffered input/output tiles + resident bf16
    # weights, with 2x headroom.  Keeps v5e (16 MiB scoped default) and v7x
    # (64 MiB physical) honest without relying on compiler defaults.
    vmem_bytes = 2 * (TB * Din * 2                 # pooled-feature tile (bf16)
                      + Din * Hp * 2 + Hp * Cp * 2 # resident weights (bf16)
                      + (Hp + Cp) * 4              # biases (f32)
                      + TB * (Hp + Cp) * 4)        # output tiles (f32)
    vmem_limit = int(min(100 * 2**20, max(4 * 2**20, 2 * vmem_bytes)))

    grid = (Bp // TB,)
    logits_p, emb_p = pl.pallas_call(
        _medical_head_kernel,
        out_shape=(
            jax.ShapeDtypeStruct((Bp, Cp), jnp.float32),
            jax.ShapeDtypeStruct((Bp, Hp), jnp.float32),
        ),
        grid_spec=pltpu.PrefetchScalarGridSpec(
            num_scalar_prefetch=0,
            grid=grid,
            in_specs=[
                pl.BlockSpec((TB, Din), lambda i: (i, 0)),   # pooled features
                pl.BlockSpec((Din, Hp), lambda i: (0, 0)),   # W_patch (resident)
                pl.BlockSpec((1, Hp), lambda i: (0, 0)),     # b_patch
                pl.BlockSpec((Hp, Cp), lambda i: (0, 0)),    # W_cls (resident)
                pl.BlockSpec((1, Cp), lambda i: (0, 0)),     # b_cls
            ],
            out_specs=(
                pl.BlockSpec((TB, Cp), lambda i: (i, 0)),    # logits
                pl.BlockSpec((TB, Hp), lambda i: (i, 0)),    # embeddings
            ),
        ),
        compiler_params=pltpu.CompilerParams(
            dimension_semantics=("parallel",),
            vmem_limit_bytes=vmem_limit),
    )(x_p, w_patch_p, b_patch_p, w_cls_p, b_cls_p)

    return {'logits': logits_p[:B, :num_classes],
            'embeddings': emb_p[:B, :hidden]}


# ---------------------------------------------------------------------------
# Pure-JAX reference: the "long way" (per-patch embed, then mean), f32 math
# with the same bf16-rounded weights — validates the pooling fold + kernel.
# ---------------------------------------------------------------------------
def _reference_forward(images, params, *, patch_size):
    B, C, H, W = images.shape
    P = patch_size
    nH, nW = H // P, W // P
    N = nH * nW
    Din = C * P * P
    patches = images.reshape(B, C, nH, P, nW, P)
    patches = patches.transpose(0, 2, 4, 1, 3, 5).reshape(B, N, Din)
    w_patch = params['w_patch'].astype(jnp.bfloat16).astype(jnp.float32)
    w_cls = params['w_cls'].astype(jnp.bfloat16).astype(jnp.float32)
    pe = jnp.einsum('bnd,dh->bnh', patches, w_patch) + params['b_patch']
    feat = jnp.mean(pe, axis=1)
    logits = feat @ w_cls + params['b_cls']
    return {'logits': logits, 'embeddings': feat}


# ---------------------------------------------------------------------------
# Deterministic parameter init (synthetic; no checkpoint loading)
# ---------------------------------------------------------------------------
def init_params(key, *, in_channels, patch_size, hidden, num_classes):
    din = in_channels * patch_size * patch_size
    k1, k2, k3, k4 = jax.random.split(key, 4)
    return {
        'w_patch': (jax.random.normal(k1, (din, hidden), jnp.float32)
                    * (1.0 / jnp.sqrt(din))),
        'b_patch': jax.random.normal(k2, (1, hidden), jnp.float32) * 0.01,
        'w_cls': (jax.random.normal(k3, (hidden, num_classes), jnp.float32)
                  * (1.0 / jnp.sqrt(hidden))),
        'b_cls': jax.random.normal(k4, (1, num_classes), jnp.float32) * 0.01,
    }


if __name__ == "__main__":
    key = jax.random.PRNGKey(0)
    k_img, k_par = jax.random.split(key)

    B, C, H, W = 2, 3, 16, 16          # small NCHW images
    patch_size = 8
    hidden = 32
    num_classes = 2

    images = jax.random.normal(k_img, (B, C, H, W), jnp.float32)
    params = init_params(k_par, in_channels=C, patch_size=patch_size,
                         hidden=hidden, num_classes=num_classes)

    fwd = jax.jit(functools.partial(specialized_medical_adapter_forward,
                                    patch_size=patch_size))
    out = fwd(images, params)
    jax.block_until_ready(out)

    assert out['logits'].shape == (B, num_classes)
    assert out['embeddings'].shape == (B, hidden)

    ref = _reference_forward(images, params, patch_size=patch_size)
    assert jnp.allclose(out['logits'], ref['logits'], rtol=5e-2, atol=5e-2)
    assert jnp.allclose(out['embeddings'], ref['embeddings'],
                        rtol=5e-2, atol=5e-2)

    print("KERNEL_OK")
</pallas_src>

<mosaic_0001>
module attributes {stable_mosaic.version = 11 : i64} {
  func.func @_medical_head_kernel(%arg0: i32, %arg1: memref<8x192xbf16, #tpu.memory_space<vmem>>, %arg2: memref<192x128xbf16, #tpu.memory_space<vmem>>, %arg3: memref<1x128xf32, #tpu.memory_space<vmem>>, %arg4: memref<128x128xbf16, #tpu.memory_space<vmem>>, %arg5: memref<1x128xf32, #tpu.memory_space<vmem>>, %arg6: memref<8x128xf32, #tpu.memory_space<vmem>>, %arg7: memref<8x128xf32, #tpu.memory_space<vmem>>) attributes {dimension_semantics = [#tpu.dimension_semantics<parallel>], iteration_bounds = array<i64: 1>, scalar_prefetch = 0 : i64, scratch_operands = 0 : i64, tpu.core_type = #tpu.core_type<tc>, window_params = [{transform_indices = @transform_0, window_bounds = array<i64: 8, 192>}, {pipeline_mode = #tpu.pipeline_mode<synchronous>, transform_indices = @transform_1, window_bounds = array<i64: 192, 128>}, {pipeline_mode = #tpu.pipeline_mode<synchronous>, transform_indices = @transform_2, window_bounds = array<i64: 1, 128>}, {pipeline_mode = #tpu.pipeline_mode<synchronous>, transform_indices = @transform_3, window_bounds = array<i64: 128, 128>}, {pipeline_mode = #tpu.pipeline_mode<synchronous>, transform_indices = @transform_4, window_bounds = array<i64: 1, 128>}, {transform_indices = @transform_5, window_bounds = array<i64: 8, 128>}, {transform_indices = @transform_6, window_bounds = array<i64: 8, 128>}]} {
    %c0 = arith.constant 0 : index
    %c0_0 = arith.constant 0 : index
    %0 = vector.load %arg1[%c0, %c0_0] : memref<8x192xbf16, #tpu.memory_space<vmem>>, vector<8x192xbf16>
    %c0_1 = arith.constant 0 : index
    %c0_2 = arith.constant 0 : index
    %1 = vector.load %arg2[%c0_1, %c0_2] : memref<192x128xbf16, #tpu.memory_space<vmem>>, vector<192x128xbf16>
    %cst = arith.constant dense<0.000000e+00> : vector<8x128xf32>
    %2 = tpu.matmul %0, %1, %cst {dimension_numbers = #tpu.dot_dimension_numbers<[1], [0], [0], [1], [0, 0, 1, 1], [], []>} : vector<8x192xbf16>, vector<192x128xbf16>, vector<8x128xf32> -> vector<8x128xf32>
    %c0_3 = arith.constant 0 : index
    %c0_4 = arith.constant 0 : index
    %3 = vector.load %arg3[%c0_3, %c0_4] : memref<1x128xf32, #tpu.memory_space<vmem>>, vector<1x128xf32>
    %4 = vector.broadcast %3 : vector<1x128xf32> to vector<8x128xf32>
    %5 = arith.addf %2, %4 : vector<8x128xf32>
    %6 = arith.truncf %5 : vector<8x128xf32> to vector<8x128xbf16>
    %c0_5 = arith.constant 0 : index
    %c0_6 = arith.constant 0 : index
    %7 = vector.load %arg4[%c0_5, %c0_6] : memref<128x128xbf16, #tpu.memory_space<vmem>>, vector<128x128xbf16>
    %cst_7 = arith.constant dense<0.000000e+00> : vector<8x128xf32>
    %8 = tpu.matmul %6, %7, %cst_7 {dimension_numbers = #tpu.dot_dimension_numbers<[1], [0], [0], [1], [0, 0, 1, 1], [], []>} : vector<8x128xbf16>, vector<128x128xbf16>, vector<8x128xf32> -> vector<8x128xf32>
    %c0_8 = arith.constant 0 : index
    %c0_9 = arith.constant 0 : index
    %9 = vector.load %arg5[%c0_8, %c0_9] : memref<1x128xf32, #tpu.memory_space<vmem>>, vector<1x128xf32>
    %10 = vector.broadcast %9 : vector<1x128xf32> to vector<8x128xf32>
    %11 = arith.addf %8, %10 : vector<8x128xf32>
    %c0_10 = arith.constant 0 : index
    %c0_11 = arith.constant 0 : index
    %12 = vector.load %arg7[%c0_10, %c0_11] : memref<8x128xf32, #tpu.memory_space<vmem>>, vector<8x128xf32>
    tpu.vector_store %arg7[%c0_10, %c0_11], %5 {strides = array<i32>} : memref<8x128xf32, #tpu.memory_space<vmem>>, vector<8x128xf32>,
    %c0_12 = arith.constant 0 : index
    %c0_13 = arith.constant 0 : index
    %13 = vector.load %arg6[%c0_12, %c0_13] : memref<8x128xf32, #tpu.memory_space<vmem>>, vector<8x128xf32>
    tpu.vector_store %arg6[%c0_12, %c0_13], %11 {strides = array<i32>} : memref<8x128xf32, #tpu.memory_space<vmem>>, vector<8x128xf32>,
    return
  }
  func.func @transform_0(%arg0: i32) -> (i32, i32) {
    %c0_i32 = arith.constant 0 : i32
    %c0_i32_0 = arith.constant 0 : i32
    return %arg0, %c0_i32 : i32, i32
  }
  func.func @transform_1(%arg0: i32) -> (i32, i32) {
    %c0_i32 = arith.constant 0 : i32
    %c0_i32_0 = arith.constant 0 : i32
    %c0_i32_1 = arith.constant 0 : i32
    return %c0_i32, %c0_i32_0 : i32, i32
  }
  func.func @transform_2(%arg0: i32) -> (i32, i32) {
    %c0_i32 = arith.constant 0 : i32
    %c0_i32_0 = arith.constant 0 : i32
    %c0_i32_1 = arith.constant 0 : i32
    return %c0_i32, %c0_i32_0 : i32, i32
  }
  func.func @transform_3(%arg0: i32) -> (i32, i32) {
    %c0_i32 = arith.constant 0 : i32
    %c0_i32_0 = arith.constant 0 : i32
    %c0_i32_1 = arith.constant 0 : i32
    return %c0_i32, %c0_i32_0 : i32, i32
  }
  func.func @transform_4(%arg0: i32) -> (i32, i32) {
    %c0_i32 = arith.constant 0 : i32
    %c0_i32_0 = arith.constant 0 : i32
    %c0_i32_1 = arith.constant 0 : i32
    return %c0_i32, %c0_i32_0 : i32, i32
  }
  func.func @transform_5(%arg0: i32) -> (i32, i32) {
    %c0_i32 = arith.constant 0 : i32
    %c0_i32_0 = arith.constant 0 : i32
    return %arg0, %c0_i32 : i32, i32
  }
  func.func @transform_6(%arg0: i32) -> (i32, i32) {
    %c0_i32 = arith.constant 0 : i32
    %c0_i32_0 = arith.constant 0 : i32
    return %arg0, %c0_i32 : i32, i32
  }
}

</mosaic_0001>

<llo_original>
// kernel: specialized_medical_adapter_forward.1
$region0: #{specialized_medical_adapter_forward.1}
  #allocation0 [shape = 'u32[]', space=smem, size = 0x4, offset = 0x4, fixed_abs, tag = 'smem constant byte address 0x4 - core index']
  #allocation1 [shape = 'u32[72,128]{1,0:T(1,128)}', space=vmem, size = 0x9000, scoped, tag = 'internal scratch']
  %s0 = inlined_call_operand.vmem [shape: bf16[8,192], index: 0, kind: input, shape index: {}]
  %s1 = inlined_call_operand.vmem [shape: bf16[192,128], index: 1, kind: input, shape index: {}]
  %s2 = inlined_call_operand.vmem [shape: f32[1,128], index: 2, kind: input, shape index: {}]
  %s3 = inlined_call_operand.vmem [shape: bf16[128,128], index: 3, kind: input, shape index: {}]
  %s4 = inlined_call_operand.vmem [shape: f32[1,128], index: 4, kind: input, shape index: {}]
  %s5 = inlined_call_operand.vmem [shape: f32[8,128], index: 5, kind: output, shape index: {0}]
  %s6 = inlined_call_operand.vmem [shape: f32[8,128], index: 6, kind: output, shape index: {1}]
  %7 = xla_tuple %s5, %s6
  %s8 = sld [smem:[#allocation0]]
  $region38: #{specialized_medical_adapter_forward.1} parent=0
    _
  %s10 = ssub.s32 1, %s8
  %s11 = scalar_select 0, %s10, %s8
  // Predicated region
  $region2: #{specialized_medical_adapter_forward.1} parent=0 // pred_check
    _
  $region3: #{specialized_medical_adapter_forward.1} parent=0 // pred_check_branch
    %13 = sbr.rel (0) target = $region5
  $region4: #{specialized_medical_adapter_forward.1} parent=0 // pred_region
    _
  $region5: #{specialized_medical_adapter_forward.1} parent=0 // pred_fallthru
    _
  // Predicated region
  $region6: #{specialized_medical_adapter_forward.1} parent=0 // pred_check
    _
  $region7: #{specialized_medical_adapter_forward.1} parent=0 // pred_check_branch
    %15 = sbr.rel (0) target = $region9
  $region8: #{specialized_medical_adapter_forward.1} parent=0 // pred_region
    _
  $region9: #{specialized_medical_adapter_forward.1} parent=0 // pred_fallthru
    _
  // Predicated region
  $region10: #{specialized_medical_adapter_forward.1} parent=0 // pred_check
    _
  $region11: #{specialized_medical_adapter_forward.1} parent=0 // pred_check_branch
    %17 = sbr.rel (0) target = $region13
  $region12: #{specialized_medical_adapter_forward.1} parent=0 // pred_region
    _
  $region13: #{specialized_medical_adapter_forward.1} parent=0 // pred_fallthru
    _
  // Predicated region
  $region14: #{specialized_medical_adapter_forward.1} parent=0 // pred_check
    _
  $region15: #{specialized_medical_adapter_forward.1} parent=0 // pred_check_branch
    %19 = sbr.rel (0) target = $region17
  $region16: #{specialized_medical_adapter_forward.1} parent=0 // pred_region
    _
  $region17: #{specialized_medical_adapter_forward.1} parent=0 // pred_fallthru
    _
  // Predicated region
  $region18: #{specialized_medical_adapter_forward.1} parent=0 // pred_check
    _
  $region19: #{specialized_medical_adapter_forward.1} parent=0 // pred_check_branch
    %21 = sbr.rel (0) target = $region21
  $region20: #{specialized_medical_adapter_forward.1} parent=0 // pred_region
    _
  $region21: #{specialized_medical_adapter_forward.1} parent=0 // pred_fallthru
    _
  %v23 = vld [vmem:[%s0] sm:$0xff]
  %v24 = vld [vmem:[%s1] sm:$0xf]
  %v25 = vld [vmem:[%s1 + $0x4] sm:$0xf]
  %v26 = vld [vmem:[%s1 + $0x8] sm:$0xf]
  %v27 = vld [vmem:[%s1 + $0xc] sm:$0xf]
  %v28 = vld [vmem:[%s1 + $0x10] sm:$0xf]
  %v29 = vld [vmem:[%s1 + $0x14] sm:$0xf]
  %v30 = vld [vmem:[%s1 + $0x18] sm:$0xf]
  %v31 = vld [vmem:[%s1 + $0x1c] sm:$0xf]
  %v32 = vld [vmem:[%s1 + $0x20] sm:$0xf]
  %v33 = vld [vmem:[%s1 + $0x24] sm:$0xf]
  %v34 = vld [vmem:[%s1 + $0x28] sm:$0xf]
  %v35 = vld [vmem:[%s1 + $0x2c] sm:$0xf]
  %v36 = vld [vmem:[%s1 + $0x30] sm:$0xf]
  %v37 = vld [vmem:[%s1 + $0x34] sm:$0xf]
  %v38 = vld [vmem:[%s1 + $0x38] sm:$0xf]
  %v39 = vld [vmem:[%s1 + $0x3c] sm:$0xf]
  %v40 = vld [vmem:[%s1 + $0x40] sm:$0xf]
  %v41 = vld [vmem:[%s1 + $0x44] sm:$0xf]
  %v42 = vld [vmem:[%s1 + $0x48] sm:$0xf]
  %v43 = vld [vmem:[%s1 + $0x4c] sm:$0xf]
  %v44 = vld [vmem:[%s1 + $0x50] sm:$0xf]
  %v45 = vld [vmem:[%s1 + $0x54] sm:$0xf]
  %v46 = vld [vmem:[%s1 + $0x58] sm:$0xf]
  %v47 = vld [vmem:[%s1 + $0x5c] sm:$0xf]
  %v48 = vld [vmem:[%s2] sm:$0x1]
  %v50 = vperm.slane %v48, 0
  %v53 = vunpack.c.l.b16 %v23
  %v54 = vunpack.c.h.b16 %v23
  %v55 = vpack.c.b16 %v53, %v53
  %v56 = vpack.c.b16 %v54, %v54
  %v82 = vunpack.c.l.b16 %v24
  %v83 = vunpack.c.l.b16 %v25
  %v84 = vunpack.c.l.b16 %v26
  %v85 = vunpack.c.l.b16 %v27
  %v86 = vunpack.c.l.b16 %v28
  %v87 = vunpack.c.l.b16 %v29
  %v88 = vunpack.c.l.b16 %v30
  %v89 = vunpack.c.l.b16 %v31
  %v90 = vunpack.c.l.b16 %v32
  %v91 = vunpack.c.l.b16 %v33
  %v92 = vunpack.c.l.b16 %v34
  %v93 = vunpack.c.l.b16 %v35
  %v94 = vunpack.c.l.b16 %v36
  %v95 = vunpack.c.l.b16 %v37
  %v96 = vunpack.c.l.b16 %v38
  %v97 = vunpack.c.l.b16 %v39
  %v98 = vunpack.c.l.b16 %v40
  %v99 = vunpack.c.l.b16 %v41
  %v100 = vunpack.c.l.b16 %v42
  %v101 = vunpack.c.l.b16 %v43
  %v102 = vunpack.c.l.b16 %v44
  %v103 = vunpack.c.l.b16 %v45
  %v104 = vunpack.c.l.b16 %v46
  %v105 = vunpack.c.l.b16 %v47
  %v106 = vpack.c.b16 %v83, %v82
  %v107 = vpack.c.b16 %v85, %v84
  %v108 = vpack.c.b16 %v87, %v86
  %v109 = vpack.c.b16 %v89, %v88
  %v110 = vpack.c.b16 %v91, %v90
  %v111 = vpack.c.b16 %v93, %v92
  %v112 = vpack.c.b16 %v95, %v94
  %v113 = vpack.c.b16 %v97, %v96
  %v114 = vpack.c.b16 %v99, %v98
  %v115 = vpack.c.b16 %v101, %v100
  %v116 = vpack.c.b16 %v103, %v102
  %v117 = vpack.c.b16 %v105, %v104
  %vm130 = vcmask 523264
  %v132 = vsel %vm130, %v56, 0
  %134 = vmatpush.bf16.msra.mxu0 %v113
  %135 = vmatpush.bf16.msra.mxu0 %v112
  %136 = vmatpush.bf16.msra.mxu0 %v111
  %137 = vmatpush.bf16.msra.mxu0 %v110
  %138 = vmatpush.bf16.msra.mxu0 %v109
  %139 = vmatpush.bf16.msra.mxu0 %v108
  %140 = vmatpush.bf16.msra.mxu0 %v107
  %141 = vmatpush.bf16.msra.mxu0 %v106
  %142 = vmatmul.bf16.gmra.mxu0 %v55
  %v143 = vpop.f32.mrf.mxu0
  %v144 = vadd.f32 %v50, %v143
  %v145 = vpop.f32.mrf.mxu0
  %146 = vdwg.mxu0
  %147 = vmatpush.bf16.msra.mxu0 0
  %148 = vmatpush.bf16.msra.mxu0 0
  %149 = vmatpush.bf16.msra.mxu0 0
  %150 = vmatpush.bf16.msra.mxu0 0
  %151 = vmatpush.bf16.msra.mxu0 %v117
  %152 = vmatpush.bf16.msra.mxu0 %v116
  %153 = vmatpush.bf16.msra.mxu0 %v115
  %154 = vmatpush.bf16.msra.mxu0 %v114
  %155 = vmatmul.bf16.gmra.mxu0 %v132
  %v156 = vpop.f32.mrf.mxu0
  %v157 = vadd.f32 %v144, %v156
  %v158 = vpop.f32.mrf.mxu0
  %159 = vdwg.mxu0
  %v160 = vpack.c.bf16 %v157, %v157
  %v161 = vld [vmem:[%s3] sm:$0xf]
  %v162 = vld [vmem:[%s3 + $0x4] sm:$0xf]
  %v163 = vld [vmem:[%s3 + $0x8] sm:$0xf]
  %v164 = vld [vmem:[%s3 + $0xc] sm:$0xf]
  %v165 = vld [vmem:[%s3 + $0x10] sm:$0xf]
  %v166 = vld [vmem:[%s3 + $0x14] sm:$0xf]
  %v167 = vld [vmem:[%s3 + $0x18] sm:$0xf]
  %v168 = vld [vmem:[%s3 + $0x1c] sm:$0xf]
  %v169 = vld [vmem:[%s3 + $0x20] sm:$0xf]
  %v170 = vld [vmem:[%s3 + $0x24] sm:$0xf]
  %v171 = vld [vmem:[%s3 + $0x28] sm:$0xf]
  %v172 = vld [vmem:[%s3 + $0x2c] sm:$0xf]
  %v173 = vld [vmem:[%s3 + $0x30] sm:$0xf]
  %v174 = vld [vmem:[%s3 + $0x34] sm:$0xf]
  %v175 = vld [vmem:[%s3 + $0x38] sm:$0xf]
  %v176 = vld [vmem:[%s3 + $0x3c] sm:$0xf]
  %v177 = vld [vmem:[%s4] sm:$0x1]
  %v179 = vperm.slane %v177, 0
  %v197 = vunpack.c.l.b16 %v161
  %v198 = vunpack.c.l.b16 %v162
  %v199 = vunpack.c.l.b16 %v163
  %v200 = vunpack.c.l.b16 %v164
  %v201 = vunpack.c.l.b16 %v165
  %v202 = vunpack.c.l.b16 %v166
  %v203 = vunpack.c.l.b16 %v167
  %v204 = vunpack.c.l.b16 %v168
  %v205 = vunpack.c.l.b16 %v169
  %v206 = vunpack.c.l.b16 %v170
  %v207 = vunpack.c.l.b16 %v171
  %v208 = vunpack.c.l.b16 %v172
  %v209 = vunpack.c.l.b16 %v173
  %v210 = vunpack.c.l.b16 %v174
  %v211 = vunpack.c.l.b16 %v175
  %v212 = vunpack.c.l.b16 %v176
  %v213 = vpack.c.b16 %v198, %v197
  %v214 = vpack.c.b16 %v200, %v199
  %v215 = vpack.c.b16 %v202, %v201
  %v216 = vpack.c.b16 %v204, %v203
  %v217 = vpack.c.b16 %v206, %v205
  %v218 = vpack.c.b16 %v208, %v207
  %v219 = vpack.c.b16 %v210, %v209
  %v220 = vpack.c.b16 %v212, %v211
  %229 = vmatpush.bf16.msra.mxu0 %v220
  %230 = vmatpush.bf16.msra.mxu0 %v219
  %231 = vmatpush.bf16.msra.mxu0 %v218
  %232 = vmatpush.bf16.msra.mxu0 %v217
  %233 = vmatpush.bf16.msra.mxu0 %v216
  %234 = vmatpush.bf16.msra.mxu0 %v215
  %235 = vmatpush.bf16.msra.mxu0 %v214
  %236 = vmatpush.bf16.msra.mxu0 %v213
  %237 = vmatmul.bf16.gmra.mxu0 %v160
  %v238 = vpop.f32.mrf.mxu0
  %v239 = vadd.f32 %v179, %v238
  %v240 = vpop.f32.mrf.mxu0
  %241 = vdwg.mxu0
  %242 = vst [vmem:[%s6] sm:$0xff] %v157
  %243 = vst [vmem:[%s5] sm:$0xff] %v239
  // Predicated region
  $region22: #{specialized_medical_adapter_forward.1} parent=0 // pred_check
    _
  $region23: #{specialized_medical_adapter_forward.1} parent=0 // pred_check_branch
    %245 = sbr.rel (0) target = $region25
  $region24: #{specialized_medical_adapter_forward.1} parent=0 // pred_region
    _
  $region25: #{specialized_medical_adapter_forward.1} parent=0 // pred_fallthru
    _
  // Predicated region
  $region26: #{specialized_medical_adapter_forward.1} parent=0 // pred_check
    _
  $region27: #{specialized_medical_adapter_forward.1} parent=0 // pred_check_branch
    %247 = sbr.rel (0) target = $region29
  $region28: #{specialized_medical_adapter_forward.1} parent=0 // pred_region
    _
  $region29: #{specialized_medical_adapter_forward.1} parent=0 // pred_fallthru
    _
  // Predicated region
  $region30: #{specialized_medical_adapter_forward.1} parent=0 // pred_check
    _
  $region31: #{specialized_medical_adapter_forward.1} parent=0 // pred_check_branch
    %249 = sbr.rel (0) target = $region33
  $region32: #{specialized_medical_adapter_forward.1} parent=0 // pred_region
    _
  $region33: #{specialized_medical_adapter_forward.1} parent=0 // pred_fallthru
    _
  // Predicated region
  $region34: #{specialized_medical_adapter_forward.1} parent=0 // pred_check
    _
  $region35: #{specialized_medical_adapter_forward.1} parent=0 // pred_check_branch
    %251 = sbr.rel (0) target = $region37
  $region36: #{specialized_medical_adapter_forward.1} parent=0 // pred_region
    _
  $region37: #{specialized_medical_adapter_forward.1} parent=0 // pred_fallthru
    _

</llo_original>
